<compile_context>
chip_gen: v5e
topology: v5e:2x2
jax: 0.10.0
libtpu: 0.0.40
codegen_flags: <defaults>
</compile_context>

<pallas_src>
import jax
import jax.numpy as jnp
from jax.experimental import pallas as pl
from jax.experimental.pallas import tpu as pltpu


def token_embedding_kernel(x_ref, w_ref, o_ref):
    # x_ref: (tl, 3C) im2col slab for one (batch, L-tile) — batch dim squeezed
    # w_ref: (3C, td) fused conv weight tile
    # o_ref: (tl, td)
    o_ref[...] = jnp.dot(
        x_ref[...], w_ref[...], preferred_element_type=jnp.float32
    ).astype(o_ref.dtype)


def _pick_tile(total, target, align):
    """Largest divisor of `total` that is a multiple of `align` and <= `target`.

    Falls back to the full extent (always a legal block) if no aligned divisor
    exists.  Full-extent or aligned blocks both satisfy the (8, 128) rule.
    """
    if total <= target:
        return total
    best = total
    t = align
    while t <= target:
        if total % t == 0:
            best = t
        t += align
    return best


def token_embedding(x, weight, *, l_tile_target=2048, d_tile_target=512):
    """x: (B, L, c_in), weight: (d_model, c_in, 3) (PyTorch Conv1d layout)."""
    B, L, C = x.shape
    D = weight.shape[0]

    # im2col along the channel axis: xc[b, t, k*C + c] = x[b, (t-1+k) mod L, c]
    # (circular padding_mode='circular', padding=1).  Done in the wrapper —
    # input bytes are negligible compared to the (B, L, D) output.
    xc = jnp.concatenate(
        [jnp.roll(x, 1, axis=1), x, jnp.roll(x, -1, axis=1)], axis=-1
    )  # (B, L, 3C)

    # Fused weight: w2[k*C + c, d] = W[d, c, k]  ->  single (3C, D) matrix.
    w2 = jnp.transpose(weight, (2, 1, 0)).reshape(3 * C, D).astype(x.dtype)

    # Tile sizes: L-tiles aligned to 8 sublanes, D-tiles aligned to 128 lanes
    # (lane-dense, unmasked stores).  Targets keep double-buffered f32 output
    # tiles ~<= 4 MiB each so the kernel fits v7x's 64 MiB VMEM comfortably.
    tl = _pick_tile(L, l_tile_target, 8)
    td = _pick_tile(D, d_tile_target, 128)
    grid = (B, L // tl, D // td)

    return pl.pallas_call(
        token_embedding_kernel,
        out_shape=jax.ShapeDtypeStruct((B, L, D), x.dtype),
        grid_spec=pltpu.PrefetchScalarGridSpec(
            num_scalar_prefetch=0,
            grid=grid,
            in_specs=[
                pl.BlockSpec((pl.Squeezed(), tl, 3 * C), lambda b, i, j: (b, i, 0)),
                pl.BlockSpec((3 * C, td), lambda b, i, j: (0, j)),
            ],
            out_specs=pl.BlockSpec((pl.Squeezed(), tl, td), lambda b, i, j: (b, i, j)),
        ),
        compiler_params=pltpu.CompilerParams(
            # No reduction axis (K is fully inside one dot) -> all parallel;
            # B * (L/tl) * (D/td) steps shard across both TCs on v7x.
            dimension_semantics=("parallel", "parallel", "parallel"),
            # Above the 32 MiB scoped default, safely below v7x's 64 MiB physical.
            vmem_limit_bytes=48 * 1024 * 1024,
        ),
    )(xc, w2)


def _reference(x, weight):
    # Pure-JAX reference: circular-padded conv1d in (B, L, C) layout, f32 accumulation.
    B, L, C = x.shape
    w = jnp.transpose(weight, (2, 1, 0)).astype(jnp.float32)      # (3, C, D)
    xf = x.astype(jnp.float32)
    xp = jnp.concatenate([xf[:, -1:, :], xf, xf[:, :1, :]], axis=1)  # (B, L+2, C)
    out = jnp.zeros((B, L, w.shape[-1]), jnp.float32)
    for k in range(3):
        out = out + jnp.einsum('blc,cd->bld', xp[:, k:k + L, :], w[k])
    return out.astype(x.dtype)


if __name__ == "__main__":
    B, L, C_IN, D_MODEL = 2, 8, 4, 32

    key = jax.random.PRNGKey(0)
    kx, kw = jax.random.split(key)

    # Input in the module's natural layout: (batch, seq_len, c_in)
    x = jax.random.normal(kx, (B, L, C_IN), dtype=jnp.float32)

    # Deterministic kaiming_normal_(mode='fan_in', nonlinearity='leaky_relu', a=0):
    #   gain = sqrt(2), fan_in = c_in * kernel_size, std = gain / sqrt(fan_in)
    fan_in = C_IN * 3
    std = (2.0 ** 0.5) / (fan_in ** 0.5)
    weight = std * jax.random.normal(kw, (D_MODEL, C_IN, 3), dtype=jnp.float32)

    y = token_embedding(x, weight)
    y = jax.block_until_ready(y)

    y_ref = _reference(x, weight)
    assert y.shape == (B, L, D_MODEL), y.shape
    assert jnp.allclose(y, y_ref, atol=1e-5, rtol=1e-5), "mismatch vs reference"

    print("KERNEL_OK")
</pallas_src>

<mosaic_0001>
module attributes {stable_mosaic.version = 11 : i64} {
  func.func @token_embedding_kernel(%arg0: i32, %arg1: i32, %arg2: i32, %arg3: memref<1x8x12xf32, #tpu.memory_space<vmem>>, %arg4: memref<12x32xf32, #tpu.memory_space<vmem>>, %arg5: memref<1x8x32xf32, #tpu.memory_space<vmem>>) attributes {dimension_semantics = [#tpu.dimension_semantics<parallel>, #tpu.dimension_semantics<parallel>, #tpu.dimension_semantics<parallel>], iteration_bounds = array<i64: 2, 1, 1>, scalar_prefetch = 0 : i64, scratch_operands = 0 : i64, tpu.core_type = #tpu.core_type<tc>, window_params = [{transform_indices = @transform_0, window_bounds = array<i64: 1, 8, 12>}, {transform_indices = @transform_1, window_bounds = array<i64: 12, 32>}, {transform_indices = @transform_2, window_bounds = array<i64: 1, 8, 32>}]} {
    %c0 = arith.constant 0 : index
    %c0_0 = arith.constant 0 : index
    %c0_1 = arith.constant 0 : index
    %0 = vector.load %arg3[%c0, %c0_0, %c0_1] : memref<1x8x12xf32, #tpu.memory_space<vmem>>, vector<1x8x12xf32>
    %1 = vector.shape_cast %0 : vector<1x8x12xf32> to vector<8x12xf32>
    %c0_2 = arith.constant 0 : index
    %c0_3 = arith.constant 0 : index
    %2 = vector.load %arg4[%c0_2, %c0_3] : memref<12x32xf32, #tpu.memory_space<vmem>>, vector<12x32xf32>
    %cst = arith.constant dense<0.000000e+00> : vector<8x32xf32>
    %3 = tpu.matmul %1, %2, %cst {dimension_numbers = #tpu.dot_dimension_numbers<[1], [0], [0], [1], [0, 0, 1, 1], [], []>} : vector<8x12xf32>, vector<12x32xf32>, vector<8x32xf32> -> vector<8x32xf32>
    %c0_4 = arith.constant 0 : index
    %c0_5 = arith.constant 0 : index
    %c0_6 = arith.constant 0 : index
    %4 = vector.load %arg5[%c0_4, %c0_5, %c0_6] : memref<1x8x32xf32, #tpu.memory_space<vmem>>, vector<1x8x32xf32>
    %5 = vector.shape_cast %4 : vector<1x8x32xf32> to vector<8x32xf32>
    %6 = vector.shape_cast %3 : vector<8x32xf32> to vector<1x8x32xf32>
    tpu.vector_store %arg5[%c0_4, %c0_5, %c0_6], %6 {strides = array<i32>} : memref<1x8x32xf32, #tpu.memory_space<vmem>>, vector<1x8x32xf32>,
    return
  }
  func.func @transform_0(%arg0: i32, %arg1: i32, %arg2: i32) -> (i32, i32, i32) {
    %c0_i32 = arith.constant 0 : i32
    %c0_i32_0 = arith.constant 0 : i32
    return %arg0, %arg1, %c0_i32 : i32, i32, i32
  }
  func.func @transform_1(%arg0: i32, %arg1: i32, %arg2: i32) -> (i32, i32) {
    %c0_i32 = arith.constant 0 : i32
    %c0_i32_0 = arith.constant 0 : i32
    return %c0_i32, %arg2 : i32, i32
  }
  func.func @transform_2(%arg0: i32, %arg1: i32, %arg2: i32) -> (i32, i32, i32) {
    %c0_i32 = arith.constant 0 : i32
    return %arg0, %arg1, %arg2 : i32, i32, i32
  }
}

</mosaic_0001>

<llo_original>
// kernel: tpu_custom_call.1
$region0: #{tpu_custom_call.1}
  #allocation0 [shape = 'u32[]', space=smem, size = 0x4, offset = 0x4, fixed_abs, tag = 'smem constant byte address 0x4 - core index']
  #allocation1 [shape = 'u32[72,128]{1,0:T(1,128)}', space=vmem, size = 0x9000, scoped, tag = 'internal scratch']
  %s0 = inlined_call_operand.hbm [shape: f32[2,8,12], index: 0, kind: input, shape index: {}]
  %s1 = inlined_call_operand.hbm [shape: f32[12,32], index: 1, kind: input, shape index: {}]
  %s2 = inlined_call_operand.hbm [shape: f32[2,8,32], index: 2, kind: output, shape index: {}]
  %s3 = sld [smem:[#allocation0]]
  $region49: #{tpu_custom_call.1} parent=0
    _
  %s5 = ssub.s32 1, %s3
  %s6 = scalar_select 0, %s5, %s3
  $region1: #{tpu_custom_call.1} parent=0
    #allocation2 [shape = 'u8[8192]{0}', space=vmem, size = 0x2000, scoped, tag = 'input window, operand 0']
    #allocation3 [shape = 's32[2]{0}', space=sflag, size = 0x8, scoped, tag = 'scoped memory for tpu_custom_call.1']
    #allocation4 [shape = 's32[2]{0}', space=sflag, size = 0x8, scoped, tag = 'scoped memory for tpu_custom_call.1']
    #allocation5 [shape = 'u8[8192]{0}', space=vmem, size = 0x2000, scoped, tag = 'input window, operand 1, single buffered']
    #allocation6 [shape = 's32[1]{0}', space=sflag, size = 0x4, scoped, tag = 'scoped memory for tpu_custom_call.1']
    #allocation7 [shape = 'u8[8192]{0}', space=vmem, size = 0x2000, scoped, tag = 'output window, operand 0']
    %7 = vsyncpa [#allocation3], 0
    %s8 = scalar_lea.sflag [#allocation3], 1
    %9 = vsyncpa %s8, 0
    %10 = vsyncpa [#allocation6], 0
    %11 = vsyncpa [#allocation4], 0
    %s12 = scalar_lea.sflag [#allocation4], 1
    %13 = vsyncpa %s12, 0
    loop: start=0, step=1, limit=4
    $region2: #{tpu_custom_call.1} parent=1 // loop_pre_header
      _
    $region3: #{tpu_custom_call.1} parent=1 // loop_header
      %s15 = sphi 0, %s19
      %p16 = scmp.ge.s32.totalorder %s15, 4
      %s22 = sphi 0, %s41
      %s23 = sphi 0, %s37
      %s24 = sphi 0, %s33
      %s25 = sphi 0, %s22
      %s26 = sphi 0, %s23
      %s27 = sphi 0, %s24
      %s28 = sphi 0, %s25
      %s29 = sphi 0, %s26
      %s30 = sphi 0, %s27
      %s46 = sphi 0, %s48
      %s49 = sphi 0, %s46
      %s50 = sphi 0, %s49
      %s66 = sphi 0, %s50
      %s72 = sphi 0, %s74
      %s75 = sphi 0, %s72
      %s76 = sphi 0, %s75
      %s92 = sphi 0, %s76
      %s102 = sphi 0, %s104
      %s105 = sphi 0, %s102
      %s106 = sphi 0, %s105
      %s122 = sphi 0, %s106
    $region4: #{tpu_custom_call.1} parent=1 // loop_header_branch
      %18 = sbr.rel (%p16) target = $region8
    $region5: #{tpu_custom_call.1} parent=1 // loop_body
      %s20 = ssub.s32 %s15, 1
      %s21 = ssub.s32 %s15, 2
      %s31 = sadd.s32 1, %s24
      %p32 = scmp.ge.s32.totalorder %s31, 1
      %s33 = scalar_select %p32, 0, %s31
      %s34 = sadd.s32 1, %s23
      %s35 = scalar_select %p32, %s34, %s23
      %p36 = scmp.ge.s32.totalorder %s35, 1
      %s37 = scalar_select %p36, 0, %s35
      %s38 = sadd.s32 1, %s22
      %s39 = scalar_select %p36, %s38, %s22
      %p40 = scmp.ge.s32.totalorder %s39, 2
      %s41 = scalar_select %p40, 0, %s39
      %s42 = ssub.s32 %s22, %s41
      %s43 = ssub.s32 %s23, %s37
      %s44 = sor.u32 %s42, %s43
      %p45 = scmp.eq.s32.totalorder %s44, 0
      %s47 = sadd.s32 %s46, 1
      %s48 = scalar_select %p45, %s46, %s47
      %p51 = pneg %p45
      %p52 = scmp.eq.s32.totalorder %s15, 1
      %p53 = por %p51, %p52
      %p54 = scmp.ne.s32.totalorder %s46, %s49
      %p55 = scmp.eq.s32.totalorder %s15, 0
      %p56 = por %p54, %p55
      %p57 = scmp.ne.s32.totalorder %s46, %s49
      %p58 = scmp.eq.s32.totalorder %s20, 1
      %p59 = por %p57, %p58
      %p60 = scmp.ne.s32.totalorder %s49, %s50
      %p61 = scmp.eq.s32.totalorder %s20, 0
      %p62 = por %p60, %p61
      %p63 = scmp.ne.s32.totalorder %s49, %s50
      %p64 = scmp.eq.s32.totalorder %s21, 1
      %p65 = por %p63, %p64
      %p67 = scmp.ne.s32.totalorder %s50, %s66
      %p68 = scmp.eq.s32.totalorder %s21, 0
      %p69 = por %p67, %p68
      %s70 = ssub.s32 %s24, %s33
      %p71 = scmp.eq.s32.totalorder %s70, 0
      %s73 = sadd.s32 %s72, 1
      %s74 = scalar_select %p71, %s72, %s73
      %p77 = pneg %p71
      %p78 = scmp.eq.s32.totalorder %s15, 1
      %p79 = por %p77, %p78
      %p80 = scmp.ne.s32.totalorder %s72, %s75
      %p81 = scmp.eq.s32.totalorder %s15, 0
      %p82 = por %p80, %p81
      %p83 = scmp.ne.s32.totalorder %s72, %s75
      %p84 = scmp.eq.s32.totalorder %s20, 1
      %p85 = por %p83, %p84
      %p86 = scmp.ne.s32.totalorder %s75, %s76
      %p87 = scmp.eq.s32.totalorder %s20, 0
      %p88 = por %p86, %p87
      %p89 = scmp.ne.s32.totalorder %s75, %s76
      %p90 = scmp.eq.s32.totalorder %s21, 1
      %p91 = por %p89, %p90
      %p93 = scmp.ne.s32.totalorder %s76, %s92
      %p94 = scmp.eq.s32.totalorder %s21, 0
      %p95 = por %p93, %p94
      %s96 = ssub.s32 %s22, %s41
      %s97 = ssub.s32 %s23, %s37
      %s98 = sor.u32 %s96, %s97
      %s99 = ssub.s32 %s24, %s33
      %s100 = sor.u32 %s98, %s99
      %p101 = scmp.eq.s32.totalorder %s100, 0
      %s103 = sadd.s32 %s102, 1
      %s104 = scalar_select %p101, %s102, %s103
      %p107 = pneg %p101
      %p108 = scmp.eq.s32.totalorder %s15, 1
      %p109 = por %p107, %p108
      %p110 = scmp.ne.s32.totalorder %s102, %s105
      %p111 = scmp.eq.s32.totalorder %s15, 0
      %p112 = por %p110, %p111
      %p113 = scmp.ne.s32.totalorder %s102, %s105
      %p114 = scmp.eq.s32.totalorder %s20, 1
      %p115 = por %p113, %p114
      %p116 = scmp.ne.s32.totalorder %s105, %s106
      %p117 = scmp.eq.s32.totalorder %s20, 0
      %p118 = por %p116, %p117
      %p119 = scmp.ne.s32.totalorder %s105, %s106
      %p120 = scmp.eq.s32.totalorder %s21, 1
      %p121 = por %p119, %p120
      %p123 = scmp.ne.s32.totalorder %s106, %s122
      %p124 = scmp.eq.s32.totalorder %s21, 0
      %p125 = por %p123, %p124
      %p126 = scmp.le.s32.totalorder 1, %s15
      %p127 = scmp.lt.s32.totalorder %s15, 3
      %p128 = pnand %p126, %p127
      %p129 = pneg %p128
      // Predicated region
      $region9: #{tpu_custom_call.1} parent=5 // pred_check
        _
      $region10: #{tpu_custom_call.1} parent=5 // pred_check_branch
        %131 = sbr.rel (%p128) target = $region12
      $region11: #{tpu_custom_call.1} parent=5 // pred_region
        %s132 = ssub.s32 %s15, 1
        // Predicated region
        $region13: #{tpu_custom_call.1} parent=11 // pred_check
          %p133 = pneg %p88
        $region14: #{tpu_custom_call.1} parent=11 // pred_check_branch
          %135 = sbr.rel (%p133) target = $region16
        $region15: #{tpu_custom_call.1} parent=11 // pred_region
          %137 = vsyncadd [#allocation6], 0
          %s138 = smul.addr %s27, 8
          %s139 = scalar_lea.hbm %s1, %s138
          %s140 = sshll.u32 %s139, 4
          %s141 = int_to_ptr.hbm [resolvable:$true] %s140
          %s142 = sshll.u32 [#allocation5], 4
          %s143 = int_to_ptr.vmem [resolvable:$true] %s142
          %148 = dma.hbm_to_vmem [thread:$0]  %s141, 256, %s143, [#allocation6], 128, 128, 8
        $region16: #{tpu_custom_call.1} parent=11 // pred_fallthru
          _
      $region12: #{tpu_custom_call.1} parent=5 // pred_fallthru
        _
      %p149 = scmp.lt.s32.totalorder %s15, 2
      // Predicated region
      $region17: #{tpu_custom_call.1} parent=5 // pred_check
        %p150 = pneg %p149
      $region18: #{tpu_custom_call.1} parent=5 // pred_check_branch
        %152 = sbr.rel (%p150) target = $region20
      $region19: #{tpu_custom_call.1} parent=5 // pred_region
        // Predicated region
        $region21: #{tpu_custom_call.1} parent=19 // pred_check
          %p153 = pneg %p56
        $region22: #{tpu_custom_call.1} parent=19 // pred_check_branch
          %155 = sbr.rel (%p153) target = $region24
        $region23: #{tpu_custom_call.1} parent=19 // pred_region
          %s156 = sand.u32 %s46, 1
          %s157 = scalar_lea.sflag [#allocation3], %s156
          %s158 = sand.u32 %s46, 1
          %s159 = smul.addr %s158, 8
          %s160 = scalar_lea.vmem [#allocation2], %s159
          %162 = vsyncadd %s157, 0
          %s163 = sadd.s32 %s23, %s22
          %s164 = smul.addr %s163, 8
          %s165 = scalar_lea.hbm %s0, %s164
          %s167 = sshll.u32 %s165, 4
          %s168 = int_to_ptr.hbm [resolvable:$true] %s167
          %s169 = sshll.u32 %s160, 4
          %s170 = int_to_ptr.vmem [resolvable:$true] %s169
          %172 = dma.hbm_to_vmem [thread:$0]  %s168, 128, %s170, %s157
        $region24: #{tpu_custom_call.1} parent=19 // pred_fallthru
          _
      $region20: #{tpu_custom_call.1} parent=5 // pred_fallthru
        _
      %p173 = scmp.le.s32.totalorder 1, %s15
      %p174 = scmp.lt.s32.totalorder %s15, 3
      %p175 = pnand %p173, %p174
      %p176 = pneg %p175
      // Predicated region
      $region25: #{tpu_custom_call.1} parent=5 // pred_check
        _
      $region26: #{tpu_custom_call.1} parent=5 // pred_check_branch
        %178 = sbr.rel (%p175) target = $region28
      $region27: #{tpu_custom_call.1} parent=5 // pred_region
        %s179 = ssub.s32 %s15, 1
        %s180 = sand.u32 %s49, 1
        %s181 = scalar_lea.sflag [#allocation3], %s180
        %s182 = sand.u32 %s49, 1
        %s183 = smul.addr %s182, 8
        %s184 = scalar_lea.vmem [#allocation2], %s183
        // Predicated region
        $region29: #{tpu_custom_call.1} parent=27 // pred_check
          %p185 = pneg %p62
        $region30: #{tpu_custom_call.1} parent=27 // pred_check_branch
          %187 = sbr.rel (%p185) target = $region32
        $region31: #{tpu_custom_call.1} parent=27 // pred_region
          %189 = dma.done %s181, 128
        $region32: #{tpu_custom_call.1} parent=27 // pred_fallthru
          _
        // Predicated region
        $region33: #{tpu_custom_call.1} parent=27 // pred_check
          %p190 = pneg %p88
        $region34: #{tpu_custom_call.1} parent=27 // pred_check_branch
          %192 = sbr.rel (%p190) target = $region36
        $region35: #{tpu_custom_call.1} parent=27 // pred_region
          %194 = dma.done [#allocation6], 256
        $region36: #{tpu_custom_call.1} parent=27 // pred_fallthru
          _
        %s195 = sand.u32 %s49, 1
        %s196 = scalar_lea.sflag [#allocation3], %s195
        %s197 = sand.u32 %s49, 1
        %s198 = smul.addr %s197, 8
        %s199 = scalar_lea.vmem [#allocation2], %s198
        %p200 = pneg %p62
        %p201 = pneg %p59
        %p202 = pneg %p88
        %p203 = pneg %p85
        %p204 = pneg %p118
        %p205 = pneg %p115
        %s206 = sand.u32 %s105, 1
        %s207 = scalar_lea.sflag [#allocation4], %s206
        %s208 = sand.u32 %s105, 1
        %s209 = smul.addr %s208, 8
        %s210 = scalar_lea.vmem [#allocation7], %s209
        %v211 = vld [vmem:[%s184] sm:$0xff]
        %v212 = vld [vmem:[#allocation5] sm:$0xff]
        %v213 = vld [vmem:[#allocation5 + $0x8] sm:$0xf]
        %vm214 = vcmask 97280
        %v216 = vsel %vm214, %v211, 0
        %vm218 = vcmask 1043456
        %v220 = vsel %vm218, %v213, 0
        %222 = vmatpush.msra.mxu0 0.0
        %223 = vmatpush.msra.mxu0 0.0
        %224 = vmatpush.msra.mxu0 0.0
        %225 = vmatpush.msra.mxu0 0.0
        %226 = vmatpush.msra.mxu0 0.0
        %227 = vmatpush.msra.mxu0 0.0
        %228 = vmatpush.msra.mxu0 0.0
        %229 = vmatpush.msra.mxu0 0.0
        %230 = vmatpush.msra.mxu0 0.0
        %231 = vmatpush.msra.mxu0 0.0
        %232 = vmatpush.msra.mxu0 0.0
        %233 = vmatpush.msra.mxu0 0.0
        %234 = vmatpush.msra.mxu0 0.0
        %235 = vmatpush.msra.mxu0 0.0
        %236 = vmatpush.msra.mxu0 %v220
        %237 = vmatpush.msra.mxu0 %v212
        %238 = vmatmul.f32.gmra.mxu0 %v216
        %v239 = vpop.f32.mrf.mxu0
        %v240 = vadd.f32 0.0, %v239
        %241 = vdwg.mxu0
        %vm242 = vcmask 261120
        %243 = vst.msk [vmem:[%s210] sm:$0xff] %vm242, %v240
        %s244 = sand.u32 %s105, 1
        %s245 = scalar_lea.sflag [#allocation4], %s244
        %s246 = sand.u32 %s105, 1
        %s247 = smul.addr %s246, 8
        %s248 = scalar_lea.vmem [#allocation7], %s247
        // Predicated region
        $region37: #{tpu_custom_call.1} parent=27 // pred_check
          %p249 = pneg %p115
        $region38: #{tpu_custom_call.1} parent=27 // pred_check_branch
          %251 = sbr.rel (%p249) target = $region40
        $region39: #{tpu_custom_call.1} parent=27 // pred_region
          %253 = vsyncadd %s245, 0
          %s254 = sadd.s32 %s27, %s26
          %s255 = sadd.s32 %s254, %s25
          %s256 = smul.addr %s255, 8
          %s257 = scalar_lea.hbm %s2, %s256
          %s259 = sshll.u32 %s248, 4
          %s260 = int_to_ptr.vmem [resolvable:$true] %s259
          %s261 = sshll.u32 %s257, 4
          %s262 = int_to_ptr.hbm [resolvable:$true] %s261
          %264 = dma.vmem_to_hbm [thread:$0]  %s260, 128, %s262, %s245
        $region40: #{tpu_custom_call.1} parent=27 // pred_fallthru
          _
      $region28: #{tpu_custom_call.1} parent=5 // pred_fallthru
        _
      %p265 = scmp.le.s32.totalorder 2, %s15
      // Predicated region
      $region41: #{tpu_custom_call.1} parent=5 // pred_check
        %p266 = pneg %p265
      $region42: #{tpu_custom_call.1} parent=5 // pred_check_branch
        %268 = sbr.rel (%p266) target = $region44
      $region43: #{tpu_custom_call.1} parent=5 // pred_region
        %s269 = ssub.s32 %s15, 2
        // Predicated region
        $region45: #{tpu_custom_call.1} parent=43 // pred_check
          %p270 = pneg %p121
        $region46: #{tpu_custom_call.1} parent=43 // pred_check_branch
          %272 = sbr.rel (%p270) target = $region48
        $region47: #{tpu_custom_call.1} parent=43 // pred_region
          %s273 = sand.u32 %s106, 1
          %s274 = scalar_lea.sflag [#allocation4], %s273
          %s275 = sand.u32 %s106, 1
          %s276 = smul.addr %s275, 8
          %s277 = scalar_lea.vmem [#allocation7], %s276
          %279 = dma.done %s274, 128
        $region48: #{tpu_custom_call.1} parent=43 // pred_fallthru
          _
      $region44: #{tpu_custom_call.1} parent=5 // pred_fallthru
        _
    $region6: #{tpu_custom_call.1} parent=1 // loop_footer
      %s19 = sadd.s32 1, %s15
    $region7: #{tpu_custom_call.1} parent=1 // loop_footer_branch
      %14 = sbr.rel target = $region3
    $region8: #{tpu_custom_call.1} parent=1 // loop_exit
      _
    %280 = vsyncpa [#allocation3], 1
    %s281 = scalar_lea.sflag [#allocation3], 1
    %282 = vsyncpa %s281, 1
    %283 = vsyncpa [#allocation6], 1
    %284 = vsyncpa [#allocation4], 1
    %s285 = scalar_lea.sflag [#allocation4], 1
    %286 = vsyncpa %s285, 1

</llo_original>
